<compile_context>
chip_gen: v5e
topology: v5e:2x2
jax: 0.10.0
libtpu: 0.0.40
codegen_flags: <defaults>
</compile_context>

<pallas_src>
import jax
import jax.numpy as jnp
from jax.experimental import pallas as pl
from jax.experimental.pallas import tpu as pltpu

# Small shapes consistent with VAE(image_size, h_dim, z_dim)
IMAGE_SIZE = 128
H_DIM = 32
Z_DIM = 4
BATCH = 16

# --- layout of the packed small-parameter slab (lane width = IMAGE_SIZE = 128) ---
_ROW_W3 = 0                       # rows 0:Z_DIM       -> w3 (Z_DIM, H_DIM)
_ROW_B1 = Z_DIM                   # row  Z_DIM         -> b1 (H_DIM,)
_ROW_B2 = Z_DIM + 1               # row  Z_DIM+1       -> b2 packed (2*Z_DIM,)
_ROW_B3 = Z_DIM + 2               # row  Z_DIM+2       -> b3 (H_DIM,)
_ROW_B4 = Z_DIM + 3               # row  Z_DIM+3       -> b4 (IMAGE_SIZE,)
_ROW_W2 = 8                       # rows 8:8+H_DIM     -> w2 packed (H_DIM, 2*Z_DIM), 8-aligned
SLAB_ROWS = ((_ROW_W2 + H_DIM + 7) // 8) * 8          # = 40 (multiple of 8 sublanes)


def vae_forward_kernel(x_ref, eps_ref, w1_ref, w4_ref, slab_ref, recon_ref, stats_ref):
    x = x_ref[...]                                                     # (TB, IMAGE_SIZE)

    # --- encoder: Linear(image_size, h_dim) -> LeakyReLU(0.1) -> Linear(h_dim, 2*z_dim)
    h = jnp.dot(x, w1_ref[...], preferred_element_type=jnp.float32)
    h = h + slab_ref[_ROW_B1:_ROW_B1 + 1, :H_DIM]
    h = jnp.maximum(h, 0.1 * h)                                        # LeakyReLU(0.1)

    # Packed encoder head: one (H_DIM, 2*Z_DIM) dot == torch Linear(h_dim, 2*z_dim);
    # mu / logvar are static lane slices (torch.chunk semantics).
    w2 = slab_ref[_ROW_W2:_ROW_W2 + H_DIM, :2 * Z_DIM]
    stats = jnp.dot(h, w2, preferred_element_type=jnp.float32)
    stats = stats + slab_ref[_ROW_B2:_ROW_B2 + 1, :2 * Z_DIM]          # (TB, 2*Z_DIM)
    mu = stats[:, :Z_DIM]
    logvar = stats[:, Z_DIM:]

    # --- reparameterize: z = mu + exp(0.5 * logvar) * eps
    z = mu + jnp.exp(0.5 * logvar) * eps_ref[...]

    # TODO(synk): the reference forward then builds a NormalizingFlowModel using an
    # undefined `AffineHalfFlow` and feeds the flow's *tuple* output to the decoder;
    # that path cannot execute in PyTorch either, so the decoder is applied to the
    # reparameterized latent z (standard VAE semantics).

    # --- decoder: Linear(z_dim, h_dim) -> ReLU -> Linear(h_dim, image_size) -> Sigmoid
    # z @ w3 has contracting dim K = Z_DIM = 4: do it on the VPU as 4 unrolled
    # broadcast-multiply-accumulates instead of paying MXU push/drain latency.
    d = slab_ref[_ROW_B3:_ROW_B3 + 1, :H_DIM] + z[:, 0:1] * slab_ref[_ROW_W3:_ROW_W3 + 1, :H_DIM]
    for k in range(1, Z_DIM):
        d = d + z[:, k:k + 1] * slab_ref[_ROW_W3 + k:_ROW_W3 + k + 1, :H_DIM]
    d = jnp.maximum(d, 0.0)                                            # ReLU

    logits = jnp.dot(d, w4_ref[...], preferred_element_type=jnp.float32)
    logits = logits + slab_ref[_ROW_B4:_ROW_B4 + 1, :IMAGE_SIZE]
    recon_ref[...] = jax.nn.sigmoid(logits)                            # Sigmoid (EUP)

    stats_ref[...] = stats                                             # packed mu|logvar


def vae_forward(x, eps, kernel_params, *, tile_b=None):
    """x: (B, IMAGE_SIZE) f32, eps: (B, Z_DIM) f32.

    kernel_params: (w1, w4, slab) from pack_params(); weights stored as (in, out).
    Returns (reconstruction, mu, logvar).
    """
    w1, w4, slab = kernel_params
    B = x.shape[0]

    if tile_b is None:
        if B <= 256:
            # Tiny batch: one grid step removes per-step overhead.  NOTE: on v7x this
            # leaves the second TensorCore idle; acceptable at this problem size.
            tile_b = B
        else:
            # >= 2 grid steps so v7x's megacore can shard the batch axis; cap at 2048
            # rows/step (~1 KB f32 per row, ~2x for double buffering -> a few MB/step,
            # far under scoped VMEM: 16 MiB v5e, 32 MiB v6e/v7x).
            tile_b = min(2048, B // 2)
    assert B % tile_b == 0, (B, tile_b)
    grid = (B // tile_b,)

    def replicated(arr):
        return pl.BlockSpec(arr.shape, lambda i: (0, 0))

    flops = 2 * B * (IMAGE_SIZE * H_DIM + H_DIM * 2 * Z_DIM + Z_DIM * H_DIM + H_DIM * IMAGE_SIZE)
    transcendentals = B * (Z_DIM + IMAGE_SIZE)     # exp in reparameterize + sigmoid
    bytes_accessed = 4 * (x.size + eps.size + w1.size + w4.size + slab.size
                          + B * IMAGE_SIZE + B * 2 * Z_DIM)

    recon, stats = pl.pallas_call(
        vae_forward_kernel,
        out_shape=(
            jax.ShapeDtypeStruct((B, IMAGE_SIZE), jnp.float32),   # reconstruction
            jax.ShapeDtypeStruct((B, 2 * Z_DIM), jnp.float32),    # packed mu | logvar
        ),
        grid=grid,
        in_specs=[
            pl.BlockSpec((tile_b, IMAGE_SIZE), lambda i: (i, 0)),  # x tile
            pl.BlockSpec((tile_b, Z_DIM), lambda i: (i, 0)),       # eps tile
            replicated(w1),
            replicated(w4),
            replicated(slab),
        ],
        out_specs=(
            pl.BlockSpec((tile_b, IMAGE_SIZE), lambda i: (i, 0)),
            pl.BlockSpec((tile_b, 2 * Z_DIM), lambda i: (i, 0)),
        ),
        compiler_params=pltpu.CompilerParams(dimension_semantics=("parallel",)),
        cost_estimate=pl.CostEstimate(flops=flops, transcendentals=transcendentals,
                                      bytes_accessed=bytes_accessed),
    )(x, eps, w1, w4, slab)

    mu, logvar = stats[:, :Z_DIM], stats[:, Z_DIM:]
    return recon, mu, logvar


def init_params(key):
    """Deterministic PyTorch-Linear-style init. Weights stored as (in, out); biases (1, out)."""
    def linear(k, fan_in, fan_out):
        kw, kb = jax.random.split(k)
        bound = 1.0 / jnp.sqrt(fan_in)
        w = jax.random.uniform(kw, (fan_in, fan_out), jnp.float32, -bound, bound)
        b = jax.random.uniform(kb, (1, fan_out), jnp.float32, -bound, bound)
        return w, b

    k1, k2, k3, k4 = jax.random.split(key, 4)
    w1, b1 = linear(k1, IMAGE_SIZE, H_DIM)       # encoder Linear 1
    w2, b2 = linear(k2, H_DIM, 2 * Z_DIM)        # encoder Linear 2 (mu | logvar packed)
    w3, b3 = linear(k3, Z_DIM, H_DIM)            # decoder Linear 1
    w4, b4 = linear(k4, H_DIM, IMAGE_SIZE)       # decoder Linear 2
    return (w1, b1, w2, b2, w3, b3, w4, b4)


def pack_params(params):
    """Build kernel parameters once: big weights stay standalone, everything small is
    packed into a single (SLAB_ROWS, IMAGE_SIZE) f32 slab -> 3 parameter DMAs total."""
    w1, b1, w2, b2, w3, b3, w4, b4 = params
    slab = jnp.zeros((SLAB_ROWS, IMAGE_SIZE), jnp.float32)
    slab = slab.at[_ROW_W3:_ROW_W3 + Z_DIM, :H_DIM].set(w3)
    slab = slab.at[_ROW_B1, :H_DIM].set(b1[0])
    slab = slab.at[_ROW_B2, :2 * Z_DIM].set(b2[0])
    slab = slab.at[_ROW_B3, :H_DIM].set(b3[0])
    slab = slab.at[_ROW_B4, :IMAGE_SIZE].set(b4[0])
    slab = slab.at[_ROW_W2:_ROW_W2 + H_DIM, :2 * Z_DIM].set(w2)
    return (w1, w4, slab)


def vae_reference(x, eps, params):
    """Pure-JAX reference (packed-head parameters) for validation."""
    w1, b1, w2, b2, w3, b3, w4, b4 = params
    h = x @ w1 + b1
    h = jnp.where(h > 0, h, 0.1 * h)             # LeakyReLU(0.1), as in the PyTorch spec
    stats = h @ w2 + b2
    mu, logvar = stats[:, :Z_DIM], stats[:, Z_DIM:]
    z = mu + jnp.exp(0.5 * logvar) * eps
    d = jnp.maximum(z @ w3 + b3, 0.0)
    recon = jax.nn.sigmoid(d @ w4 + b4)
    return recon, mu, logvar


if __name__ == "__main__":
    key = jax.random.PRNGKey(0)
    k_param, k_x, k_eps = jax.random.split(key, 3)

    packed_params = init_params(k_param)
    kernel_params = pack_params(packed_params)

    x = jax.random.normal(k_x, (BATCH, IMAGE_SIZE), jnp.float32)
    eps = jax.random.normal(k_eps, (BATCH, Z_DIM), jnp.float32)   # reparameterization noise

    recon, mu, logvar = vae_forward(x, eps, kernel_params)
    jax.block_until_ready((recon, mu, logvar))

    # sanity check against pure-JAX reference
    r_ref, mu_ref, lv_ref = vae_reference(x, eps, packed_params)
    assert recon.shape == (BATCH, IMAGE_SIZE)
    assert mu.shape == (BATCH, Z_DIM) and logvar.shape == (BATCH, Z_DIM)
    assert jnp.allclose(recon, r_ref, atol=1e-3, rtol=1e-3)
    assert jnp.allclose(mu, mu_ref, atol=1e-3, rtol=1e-3)
    assert jnp.allclose(logvar, lv_ref, atol=1e-3, rtol=1e-3)

    print("KERNEL_OK")
</pallas_src>

<mosaic_0001>
module attributes {stable_mosaic.version = 11 : i64} {
  func.func @vae_forward_kernel(%arg0: i32, %arg1: memref<16x128xf32, #tpu.memory_space<vmem>>, %arg2: memref<16x4xf32, #tpu.memory_space<vmem>>, %arg3: memref<128x32xf32, #tpu.memory_space<vmem>>, %arg4: memref<32x128xf32, #tpu.memory_space<vmem>>, %arg5: memref<40x128xf32, #tpu.memory_space<vmem>>, %arg6: memref<16x128xf32, #tpu.memory_space<vmem>>, %arg7: memref<16x8xf32, #tpu.memory_space<vmem>>) attributes {dimension_semantics = [#tpu.dimension_semantics<parallel>], iteration_bounds = array<i64: 1>, scalar_prefetch = 0 : i64, scratch_operands = 0 : i64, tpu.core_type = #tpu.core_type<tc>, window_params = [{transform_indices = @transform_0, window_bounds = array<i64: 16, 128>}, {transform_indices = @transform_1, window_bounds = array<i64: 16, 4>}, {pipeline_mode = #tpu.pipeline_mode<synchronous>, transform_indices = @transform_2, window_bounds = array<i64: 128, 32>}, {pipeline_mode = #tpu.pipeline_mode<synchronous>, transform_indices = @transform_3, window_bounds = array<i64: 32, 128>}, {pipeline_mode = #tpu.pipeline_mode<synchronous>, transform_indices = @transform_4, window_bounds = array<i64: 40, 128>}, {transform_indices = @transform_5, window_bounds = array<i64: 16, 128>}, {transform_indices = @transform_6, window_bounds = array<i64: 16, 8>}]} {
    %c0 = arith.constant 0 : index
    %c0_0 = arith.constant 0 : index
    %0 = vector.load %arg1[%c0, %c0_0] : memref<16x128xf32, #tpu.memory_space<vmem>>, vector<16x128xf32>
    %c0_1 = arith.constant 0 : index
    %c0_2 = arith.constant 0 : index
    %1 = vector.load %arg3[%c0_1, %c0_2] : memref<128x32xf32, #tpu.memory_space<vmem>>, vector<128x32xf32>
    %cst = arith.constant dense<0.000000e+00> : vector<16x32xf32>
    %2 = tpu.matmul %0, %1, %cst {dimension_numbers = #tpu.dot_dimension_numbers<[1], [0], [0], [1], [0, 0, 1, 1], [], []>} : vector<16x128xf32>, vector<128x32xf32>, vector<16x32xf32> -> vector<16x32xf32>
    %c4 = arith.constant 4 : index
    %c0_3 = arith.constant 0 : index
    %3 = vector.load %arg5[%c4, %c0_3] : memref<40x128xf32, #tpu.memory_space<vmem>>, vector<1x32xf32>
    %4 = vector.broadcast %3 : vector<1x32xf32> to vector<16x32xf32>
    %5 = arith.addf %2, %4 : vector<16x32xf32>
    %cst_4 = arith.constant 1.000000e-01 : f32
    %6 = vector.broadcast %cst_4 : f32 to vector<16x32xf32>
    %7 = arith.mulf %6, %5 : vector<16x32xf32>
    %8 = arith.maximumf %5, %7 : vector<16x32xf32>
    %c8 = arith.constant 8 : index
    %c0_5 = arith.constant 0 : index
    %9 = vector.load %arg5[%c8, %c0_5] : memref<40x128xf32, #tpu.memory_space<vmem>>, vector<32x8xf32>
    %cst_6 = arith.constant dense<0.000000e+00> : vector<16x8xf32>
    %10 = tpu.matmul %8, %9, %cst_6 {dimension_numbers = #tpu.dot_dimension_numbers<[1], [0], [0], [1], [0, 0, 1, 1], [], []>} : vector<16x32xf32>, vector<32x8xf32>, vector<16x8xf32> -> vector<16x8xf32>
    %c5 = arith.constant 5 : index
    %c0_7 = arith.constant 0 : index
    %11 = vector.load %arg5[%c5, %c0_7] : memref<40x128xf32, #tpu.memory_space<vmem>>, vector<1x8xf32>
    %12 = vector.broadcast %11 : vector<1x8xf32> to vector<16x8xf32>
    %13 = arith.addf %10, %12 : vector<16x8xf32>
    %14 = vector.extract_strided_slice %13 {offsets = [0, 0], sizes = [16, 4], strides = [1, 1]} : vector<16x8xf32> to vector<16x4xf32>
    %15 = vector.extract_strided_slice %13 {offsets = [0, 4], sizes = [16, 4], strides = [1, 1]} : vector<16x8xf32> to vector<16x4xf32>
    %cst_8 = arith.constant 5.000000e-01 : f32
    %16 = vector.broadcast %cst_8 : f32 to vector<16x4xf32>
    %17 = arith.mulf %16, %15 : vector<16x4xf32>
    %18 = math.exp %17 : vector<16x4xf32>
    %c0_9 = arith.constant 0 : index
    %c0_10 = arith.constant 0 : index
    %19 = vector.load %arg2[%c0_9, %c0_10] : memref<16x4xf32, #tpu.memory_space<vmem>>, vector<16x4xf32>
    %20 = arith.mulf %18, %19 : vector<16x4xf32>
    %21 = arith.addf %14, %20 : vector<16x4xf32>
    %c6 = arith.constant 6 : index
    %c0_11 = arith.constant 0 : index
    %22 = vector.load %arg5[%c6, %c0_11] : memref<40x128xf32, #tpu.memory_space<vmem>>, vector<1x32xf32>
    %23 = vector.extract_strided_slice %21 {offsets = [0, 0], sizes = [16, 1], strides = [1, 1]} : vector<16x4xf32> to vector<16x1xf32>
    %c0_12 = arith.constant 0 : index
    %c0_13 = arith.constant 0 : index
    %24 = vector.load %arg5[%c0_12, %c0_13] : memref<40x128xf32, #tpu.memory_space<vmem>>, vector<1x32xf32>
    %25 = vector.broadcast %23 : vector<16x1xf32> to vector<16x32xf32>
    %26 = vector.broadcast %24 : vector<1x32xf32> to vector<16x32xf32>
    %27 = arith.mulf %25, %26 : vector<16x32xf32>
    %28 = vector.broadcast %22 : vector<1x32xf32> to vector<16x32xf32>
    %29 = arith.addf %28, %27 : vector<16x32xf32>
    %30 = vector.extract_strided_slice %21 {offsets = [0, 1], sizes = [16, 1], strides = [1, 1]} : vector<16x4xf32> to vector<16x1xf32>
    %c1 = arith.constant 1 : index
    %c0_14 = arith.constant 0 : index
    %31 = vector.load %arg5[%c1, %c0_14] : memref<40x128xf32, #tpu.memory_space<vmem>>, vector<1x32xf32>
    %32 = vector.broadcast %30 : vector<16x1xf32> to vector<16x32xf32>
    %33 = vector.broadcast %31 : vector<1x32xf32> to vector<16x32xf32>
    %34 = arith.mulf %32, %33 : vector<16x32xf32>
    %35 = arith.addf %29, %34 : vector<16x32xf32>
    %36 = vector.extract_strided_slice %21 {offsets = [0, 2], sizes = [16, 1], strides = [1, 1]} : vector<16x4xf32> to vector<16x1xf32>
    %c2 = arith.constant 2 : index
    %c0_15 = arith.constant 0 : index
    %37 = vector.load %arg5[%c2, %c0_15] : memref<40x128xf32, #tpu.memory_space<vmem>>, vector<1x32xf32>
    %38 = vector.broadcast %36 : vector<16x1xf32> to vector<16x32xf32>
    %39 = vector.broadcast %37 : vector<1x32xf32> to vector<16x32xf32>
    %40 = arith.mulf %38, %39 : vector<16x32xf32>
    %41 = arith.addf %35, %40 : vector<16x32xf32>
    %42 = vector.extract_strided_slice %21 {offsets = [0, 3], sizes = [16, 1], strides = [1, 1]} : vector<16x4xf32> to vector<16x1xf32>
    %c3 = arith.constant 3 : index
    %c0_16 = arith.constant 0 : index
    %43 = vector.load %arg5[%c3, %c0_16] : memref<40x128xf32, #tpu.memory_space<vmem>>, vector<1x32xf32>
    %44 = vector.broadcast %42 : vector<16x1xf32> to vector<16x32xf32>
    %45 = vector.broadcast %43 : vector<1x32xf32> to vector<16x32xf32>
    %46 = arith.mulf %44, %45 : vector<16x32xf32>
    %47 = arith.addf %41, %46 : vector<16x32xf32>
    %cst_17 = arith.constant 0.000000e+00 : f32
    %48 = vector.broadcast %cst_17 : f32 to vector<16x32xf32>
    %49 = arith.maximumf %47, %48 : vector<16x32xf32>
    %c0_18 = arith.constant 0 : index
    %c0_19 = arith.constant 0 : index
    %50 = vector.load %arg4[%c0_18, %c0_19] : memref<32x128xf32, #tpu.memory_space<vmem>>, vector<32x128xf32>
    %cst_20 = arith.constant dense<0.000000e+00> : vector<16x128xf32>
    %51 = tpu.matmul %49, %50, %cst_20 {dimension_numbers = #tpu.dot_dimension_numbers<[1], [0], [0], [1], [0, 0, 1, 1], [], []>} : vector<16x32xf32>, vector<32x128xf32>, vector<16x128xf32> -> vector<16x128xf32>
    %c7 = arith.constant 7 : index
    %c0_21 = arith.constant 0 : index
    %52 = vector.load %arg5[%c7, %c0_21] : memref<40x128xf32, #tpu.memory_space<vmem>>, vector<1x128xf32>
    %53 = vector.broadcast %52 : vector<1x128xf32> to vector<16x128xf32>
    %54 = arith.addf %51, %53 : vector<16x128xf32>
    %55 = arith.negf %54 : vector<16x128xf32>
    %56 = math.exp %55 : vector<16x128xf32>
    %cst_22 = arith.constant 1.000000e+00 : f32
    %57 = vector.broadcast %cst_22 : f32 to vector<16x128xf32>
    %58 = arith.addf %57, %56 : vector<16x128xf32>
    %59 = arith.divf %57, %58 : vector<16x128xf32>
    %c0_23 = arith.constant 0 : index
    %c0_24 = arith.constant 0 : index
    %60 = vector.load %arg6[%c0_23, %c0_24] : memref<16x128xf32, #tpu.memory_space<vmem>>, vector<16x128xf32>
    tpu.vector_store %arg6[%c0_23, %c0_24], %59 {strides = array<i32>} : memref<16x128xf32, #tpu.memory_space<vmem>>, vector<16x128xf32>,
    %c0_25 = arith.constant 0 : index
    %c0_26 = arith.constant 0 : index
    %61 = vector.load %arg7[%c0_25, %c0_26] : memref<16x8xf32, #tpu.memory_space<vmem>>, vector<16x8xf32>
    tpu.vector_store %arg7[%c0_25, %c0_26], %13 {strides = array<i32>} : memref<16x8xf32, #tpu.memory_space<vmem>>, vector<16x8xf32>,
    return
  }
  func.func @transform_0(%arg0: i32) -> (i32, i32) {
    %c0_i32 = arith.constant 0 : i32
    %c0_i32_0 = arith.constant 0 : i32
    return %arg0, %c0_i32 : i32, i32
  }
  func.func @transform_1(%arg0: i32) -> (i32, i32) {
    %c0_i32 = arith.constant 0 : i32
    %c0_i32_0 = arith.constant 0 : i32
    return %arg0, %c0_i32 : i32, i32
  }
  func.func @transform_2(%arg0: i32) -> (i32, i32) {
    %c0_i32 = arith.constant 0 : i32
    %c0_i32_0 = arith.constant 0 : i32
    %c0_i32_1 = arith.constant 0 : i32
    return %c0_i32, %c0_i32_0 : i32, i32
  }
  func.func @transform_3(%arg0: i32) -> (i32, i32) {
    %c0_i32 = arith.constant 0 : i32
    %c0_i32_0 = arith.constant 0 : i32
    %c0_i32_1 = arith.constant 0 : i32
    return %c0_i32, %c0_i32_0 : i32, i32
  }
  func.func @transform_4(%arg0: i32) -> (i32, i32) {
    %c0_i32 = arith.constant 0 : i32
    %c0_i32_0 = arith.constant 0 : i32
    %c0_i32_1 = arith.constant 0 : i32
    return %c0_i32, %c0_i32_0 : i32, i32
  }
  func.func @transform_5(%arg0: i32) -> (i32, i32) {
    %c0_i32 = arith.constant 0 : i32
    %c0_i32_0 = arith.constant 0 : i32
    return %arg0, %c0_i32 : i32, i32
  }
  func.func @transform_6(%arg0: i32) -> (i32, i32) {
    %c0_i32 = arith.constant 0 : i32
    %c0_i32_0 = arith.constant 0 : i32
    return %arg0, %c0_i32 : i32, i32
  }
}

</mosaic_0001>

<llo_original>
// kernel: tpu_custom_call.1
$region0: #{tpu_custom_call.1}
  #allocation0 [shape = 'u32[]', space=smem, size = 0x4, offset = 0x4, fixed_abs, tag = 'smem constant byte address 0x4 - core index']
  #allocation1 [shape = 'u32[72,128]{1,0:T(1,128)}', space=vmem, size = 0x9000, scoped, tag = 'internal scratch']
  %s0 = inlined_call_operand.vmem [shape: f32[16,128], index: 0, kind: input, shape index: {}]
  %s1 = inlined_call_operand.vmem [shape: f32[16,4], index: 1, kind: input, shape index: {}]
  %s2 = inlined_call_operand.vmem [shape: f32[128,32], index: 2, kind: input, shape index: {}]
  %s3 = inlined_call_operand.vmem [shape: f32[32,128], index: 3, kind: input, shape index: {}]
  %s4 = inlined_call_operand.vmem [shape: f32[40,128], index: 4, kind: input, shape index: {}]
  %s5 = inlined_call_operand.hbm [shape: f32[16,128], index: 5, kind: output, shape index: {0}]
  %s6 = inlined_call_operand.vmem [shape: f32[16,8], index: 6, kind: output, shape index: {1}]
  %7 = xla_tuple %s5, %s6
  %s8 = sld [smem:[#allocation0]]
  $region38: #{tpu_custom_call.1} parent=0
    _
  %s10 = ssub.s32 1, %s8
  %s11 = scalar_select 0, %s10, %s8
  $region1: #{tpu_custom_call.1} parent=0
    #allocation2 [shape = 'u8[8192]{0}', space=vmem, size = 0x2000, scoped, tag = 'output window, operand 0, single buffered']
    #allocation3 [shape = 's32[1]{0}', space=sflag, size = 0x4, scoped, tag = 'scoped memory for tpu_custom_call.1']
    %12 = vsyncpa [#allocation3], 0
    // Predicated region
    $region2: #{tpu_custom_call.1} parent=1 // pred_check
      _
    $region3: #{tpu_custom_call.1} parent=1 // pred_check_branch
      %14 = sbr.rel (0) target = $region5
    $region4: #{tpu_custom_call.1} parent=1 // pred_region
      _
    $region5: #{tpu_custom_call.1} parent=1 // pred_fallthru
      _
    // Predicated region
    $region6: #{tpu_custom_call.1} parent=1 // pred_check
      _
    $region7: #{tpu_custom_call.1} parent=1 // pred_check_branch
      %16 = sbr.rel (0) target = $region9
    $region8: #{tpu_custom_call.1} parent=1 // pred_region
      _
    $region9: #{tpu_custom_call.1} parent=1 // pred_fallthru
      _
    // Predicated region
    $region10: #{tpu_custom_call.1} parent=1 // pred_check
      _
    $region11: #{tpu_custom_call.1} parent=1 // pred_check_branch
      %18 = sbr.rel (0) target = $region13
    $region12: #{tpu_custom_call.1} parent=1 // pred_region
      _
    $region13: #{tpu_custom_call.1} parent=1 // pred_fallthru
      _
    // Predicated region
    $region14: #{tpu_custom_call.1} parent=1 // pred_check
      _
    $region15: #{tpu_custom_call.1} parent=1 // pred_check_branch
      %20 = sbr.rel (0) target = $region17
    $region16: #{tpu_custom_call.1} parent=1 // pred_region
      _
    $region17: #{tpu_custom_call.1} parent=1 // pred_fallthru
      _
    // Predicated region
    $region18: #{tpu_custom_call.1} parent=1 // pred_check
      _
    $region19: #{tpu_custom_call.1} parent=1 // pred_check_branch
      %22 = sbr.rel (0) target = $region21
    $region20: #{tpu_custom_call.1} parent=1 // pred_region
      _
    $region21: #{tpu_custom_call.1} parent=1 // pred_fallthru
      _
    %v23 = vld [vmem:[%s0] sm:$0xff]
    %v24 = vld [vmem:[%s0 + $0x8] sm:$0xff]
    %v25 = vld [vmem:[%s2] sm:$0xff]
    %v26 = vld [vmem:[%s2 + $0x8] sm:$0xff]
    %v27 = vld [vmem:[%s2 + $0x10] sm:$0xff]
    %v28 = vld [vmem:[%s2 + $0x18] sm:$0xff]
    %v29 = vld [vmem:[%s2 + $0x20] sm:$0xff]
    %v30 = vld [vmem:[%s2 + $0x28] sm:$0xff]
    %v31 = vld [vmem:[%s2 + $0x30] sm:$0xff]
    %v32 = vld [vmem:[%s2 + $0x38] sm:$0xff]
    %v33 = vld [vmem:[%s2 + $0x40] sm:$0xff]
    %v34 = vld [vmem:[%s2 + $0x48] sm:$0xff]
    %v35 = vld [vmem:[%s2 + $0x50] sm:$0xff]
    %v36 = vld [vmem:[%s2 + $0x58] sm:$0xff]
    %v37 = vld [vmem:[%s2 + $0x60] sm:$0xff]
    %v38 = vld [vmem:[%s2 + $0x68] sm:$0xff]
    %v39 = vld [vmem:[%s2 + $0x70] sm:$0xff]
    %v40 = vld [vmem:[%s2 + $0x78] sm:$0xff]
    %v41 = vld [vmem:[%s4 + $0x4] sm:$0x1]
    %v42 = vperm.slane %v41, 0
    %43 = vmatpush.msra.mxu0 %v40
    %44 = vmatpush.msra.mxu0 %v39
    %45 = vmatpush.msra.mxu0 %v38
    %46 = vmatpush.msra.mxu0 %v37
    %47 = vmatpush.msra.mxu0 %v36
    %48 = vmatpush.msra.mxu0 %v35
    %49 = vmatpush.msra.mxu0 %v34
    %50 = vmatpush.msra.mxu0 %v33
    %51 = vmatpush.msra.mxu0 %v32
    %52 = vmatpush.msra.mxu0 %v31
    %53 = vmatpush.msra.mxu0 %v30
    %54 = vmatpush.msra.mxu0 %v29
    %55 = vmatpush.msra.mxu0 %v28
    %56 = vmatpush.msra.mxu0 %v27
    %57 = vmatpush.msra.mxu0 %v26
    %58 = vmatpush.msra.mxu0 %v25
    %59 = vmatmul.f32.gmra.mxu0 %v23
    %v60 = vpop.f32.mrf.mxu0
    %v61 = vadd.f32 %v42, %v60
    %62 = vmatmul.f32.gmra.mxu0 %v24
    %v63 = vpop.f32.mrf.mxu0
    %v64 = vadd.f32 %v42, %v63
    %65 = vdwg.mxu0
    %v66 = vmul.f32 %v61, 0.1
    %v67 = vmul.f32 %v64, 0.1
    %v68 = vmax.f32 %v61, %v66
    %v69 = vmax.f32 %v64, %v67
    %v70 = vld [vmem:[%s4 + $0x8] sm:$0xff]
    %v71 = vld [vmem:[%s4 + $0x10] sm:$0xff]
    %v72 = vld [vmem:[%s4 + $0x18] sm:$0xff]
    %v73 = vld [vmem:[%s4 + $0x20] sm:$0xff]
    %v74 = vld [vmem:[%s4 + $0x5] sm:$0x1]
    %v75 = vperm.slane %v74, 0
    %vm76 = vcmask 261120
    %v78 = vsel %vm76, %v68, 0
    %v81 = vsel %vm76, %v69, 0
    %83 = vmatpush.msra.mxu0 0.0
    %84 = vmatpush.msra.mxu0 0.0
    %85 = vmatpush.msra.mxu0 0.0
    %86 = vmatpush.msra.mxu0 0.0
    %87 = vmatpush.msra.mxu0 0.0
    %88 = vmatpush.msra.mxu0 0.0
    %89 = vmatpush.msra.mxu0 0.0
    %90 = vmatpush.msra.mxu0 0.0
    %91 = vmatpush.msra.mxu0 0.0
    %92 = vmatpush.msra.mxu0 0.0
    %93 = vmatpush.msra.mxu0 0.0
    %94 = vmatpush.msra.mxu0 0.0
    %95 = vmatpush.msra.mxu0 %v73
    %96 = vmatpush.msra.mxu0 %v72
    %97 = vmatpush.msra.mxu0 %v71
    %98 = vmatpush.msra.mxu0 %v70
    %99 = vmatmul.f32.gmra.mxu0 %v78
    %v100 = vpop.f32.mrf.mxu0
    %v101 = vadd.f32 %v75, %v100
    %102 = vmatmul.f32.gmra.mxu0 %v81
    %v103 = vpop.f32.mrf.mxu0
    %v104 = vadd.f32 %v75, %v103
    %105 = vdwg.mxu0
    %v106 = vmul.f32 %v101, 0.5
    %v107 = vmul.f32 %v104, 0.5
    %v108 = vmul.f32 %v106, 1.442695
    %v109 = vpow.pop %v108
    %v110 = vmul.f32 %v107, 1.442695
    %v111 = vpow.pop %v110
    %v112 = vld [vmem:[%s1] sm:$0xff]
    %v113 = vld [vmem:[%s1 + $0x8] sm:$0xff]
    %116 = vrot.lane.b32.xlu0 %v112, 4
    %v117 = vpop.permute.xlu0 %116
    %118 = vrot.lane.b32.xlu0 %v113, 4
    %v119 = vpop.permute.xlu0 %118
    %v122 = vmul.f32 %v109, %v117
    %v123 = vmul.f32 %v111, %v119
    %126 = vrot.lane.b32.xlu0 %v122, 124
    %v127 = vpop.permute.xlu0 %126
    %128 = vrot.lane.b32.xlu0 %v123, 124
    %v129 = vpop.permute.xlu0 %128
    %v132 = vadd.f32 %v101, %v127
    %v133 = vadd.f32 %v104, %v129
    %v134 = vld [vmem:[%s4 + $0x6] sm:$0x1]
    %v135 = vld [vmem:[%s4] sm:$0x1]
    %137 = vset.pattern.permute.xlu0 0
    %138 = vperm.xlu0 %137, %v132
    %v139 = vpop.permute.xlu0 %138
    %142 = vset.pattern.permute.xlu0 0
    %143 = vperm.xlu0 %142, %v133
    %v144 = vpop.permute.xlu0 %143
    %v146 = vperm.slane %v135, 0
    %v147 = vmul.f32 %v139, %v146
    %v148 = vmul.f32 %v144, %v146
    %v149 = vperm.slane %v134, 0
    %v150 = vadd.f32 %v149, %v147
    %v151 = vadd.f32 %v149, %v148
    %v152 = vld [vmem:[%s4 + $0x1] sm:$0x1]
    %153 = vset.pattern.permute.xlu0 1
    %154 = vperm.xlu0 %153, %v132
    %v155 = vpop.permute.xlu0 %154
    %157 = vset.pattern.permute.xlu0 1
    %158 = vperm.xlu0 %157, %v133
    %v159 = vpop.permute.xlu0 %158
    %v161 = vperm.slane %v152, 0
    %v162 = vmul.f32 %v155, %v161
    %v163 = vmul.f32 %v159, %v161
    %v164 = vadd.f32 %v150, %v162
    %v165 = vadd.f32 %v151, %v163
    %v166 = vld [vmem:[%s4 + $0x2] sm:$0x1]
    %167 = vset.pattern.permute.xlu0 2
    %168 = vperm.xlu0 %167, %v132
    %v169 = vpop.permute.xlu0 %168
    %171 = vset.pattern.permute.xlu0 2
    %172 = vperm.xlu0 %171, %v133
    %v173 = vpop.permute.xlu0 %172
    %v175 = vperm.slane %v166, 0
    %v176 = vmul.f32 %v169, %v175
    %v177 = vmul.f32 %v173, %v175
    %v178 = vadd.f32 %v164, %v176
    %v179 = vadd.f32 %v165, %v177
    %v180 = vld [vmem:[%s4 + $0x3] sm:$0x1]
    %181 = vset.pattern.permute.xlu0 3
    %182 = vperm.xlu0 %181, %v132
    %v183 = vpop.permute.xlu0 %182
    %185 = vset.pattern.permute.xlu0 3
    %186 = vperm.xlu0 %185, %v133
    %v187 = vpop.permute.xlu0 %186
    %v189 = vperm.slane %v180, 0
    %v190 = vmul.f32 %v183, %v189
    %v191 = vmul.f32 %v187, %v189
    %v192 = vadd.f32 %v178, %v190
    %v193 = vadd.f32 %v179, %v191
    %v194 = vmax.f32 %v192, 0.0
    %v195 = vmax.f32 %v193, 0.0
    %v196 = vld [vmem:[%s3] sm:$0xff]
    %v197 = vld [vmem:[%s3 + $0x8] sm:$0xff]
    %v198 = vld [vmem:[%s3 + $0x10] sm:$0xff]
    %v199 = vld [vmem:[%s3 + $0x18] sm:$0xff]
    %v200 = vld [vmem:[%s4 + $0x7] sm:$0x1]
    %v201 = vperm.slane %v200, 0
    %v203 = vsel %vm76, %v194, 0
    %v206 = vsel %vm76, %v195, 0
    %208 = vmatpush.msra.mxu0 0.0
    %209 = vmatpush.msra.mxu0 0.0
    %210 = vmatpush.msra.mxu0 0.0
    %211 = vmatpush.msra.mxu0 0.0
    %212 = vmatpush.msra.mxu0 0.0
    %213 = vmatpush.msra.mxu0 0.0
    %214 = vmatpush.msra.mxu0 0.0
    %215 = vmatpush.msra.mxu0 0.0
    %216 = vmatpush.msra.mxu0 0.0
    %217 = vmatpush.msra.mxu0 0.0
    %218 = vmatpush.msra.mxu0 0.0
    %219 = vmatpush.msra.mxu0 0.0
    %220 = vmatpush.msra.mxu0 %v199
    %221 = vmatpush.msra.mxu0 %v198
    %222 = vmatpush.msra.mxu0 %v197
    %223 = vmatpush.msra.mxu0 %v196
    %224 = vmatmul.f32.gmra.mxu0 %v203
    %v225 = vpop.f32.mrf.mxu0
    %v226 = vadd.f32 %v201, %v225
    %227 = vmatmul.f32.gmra.mxu0 %v206
    %v228 = vpop.f32.mrf.mxu0
    %v229 = vadd.f32 %v201, %v228
    %230 = vdwg.mxu0
    %v231 = vxor.u32 %v226, 2147483648
    %v232 = vxor.u32 %v229, 2147483648
    %v233 = vmul.f32 %v231, 1.442695
    %v234 = vpow.pop %v233
    %v235 = vmul.f32 %v232, 1.442695
    %v236 = vpow.pop %v235
    %v237 = vadd.f32 %v234, 1.0
    %v238 = vadd.f32 %v236, 1.0
    %v239 = vrcp.pop %v237
    %v240 = vmul.f32 %v237, %v239
    %v241 = vsub.f32 1.0, %v240
    %v242 = vmul.f32 %v239, %v241
    %v243 = vadd.f32 %v239, %v242
    %vm244 = vweird.f32 %v237
    %vm245 = vweird.f32 %v239
    %vm246 = vmor %vm244, %vm245
    %v247 = vsel %vm246, %v239, %v243
    %v248 = vand.u32 2147483647, %v237
    %vm249 = vcmp.eq.f32.partialorder %v248, 8.507059e+37
    %v250 = vand.u32 %v237, 2147483648
    %v251 = vor.u32 1.1754944e-38, %v250
    %v252 = vsel %vm249, %v251, %v247
    %v253 = vmul.f32 1.0, %v252
    %v254 = vrcp.pop %v238
    %v255 = vmul.f32 %v238, %v254
    %v256 = vsub.f32 1.0, %v255
    %v257 = vmul.f32 %v254, %v256
    %v258 = vadd.f32 %v254, %v257
    %vm259 = vweird.f32 %v238
    %vm260 = vweird.f32 %v254
    %vm261 = vmor %vm259, %vm260
    %v262 = vsel %vm261, %v254, %v258
    %v263 = vand.u32 2147483647, %v238
    %vm264 = vcmp.eq.f32.partialorder %v263, 8.507059e+37
    %v265 = vand.u32 %v238, 2147483648
    %v266 = vor.u32 1.1754944e-38, %v265
    %v267 = vsel %vm264, %v266, %v262
    %v268 = vmul.f32 1.0, %v267
    %269 = vst [vmem:[#allocation2] sm:$0xff] %v253
    %270 = vst [vmem:[#allocation2 + $0x8] sm:$0xff] %v268
    %vm271 = vcmask 64512
    %272 = vst.msk [vmem:[%s6] sm:$0xff] %vm271, %v101
    %273 = vst.msk [vmem:[%s6 + $0x8] sm:$0xff] %vm271, %v104
    // Predicated region
    $region22: #{tpu_custom_call.1} parent=1 // pred_check
      _
    $region23: #{tpu_custom_call.1} parent=1 // pred_check_branch
      %275 = sbr.rel (0) target = $region25
    $region24: #{tpu_custom_call.1} parent=1 // pred_region
      %277 = vsyncadd [#allocation3], 0
      %s278 = sshll.u32 [#allocation2], 4
      %s279 = int_to_ptr.vmem [resolvable:$true] %s278
      %s280 = sshll.u32 %s5, 4
      %s281 = int_to_ptr.hbm [resolvable:$true] %s280
      %286 = dma.vmem_to_hbm [thread:$0]  %s279, 256, %s281, [#allocation3], 128, 128, 8
    $region25: #{tpu_custom_call.1} parent=1 // pred_fallthru
      _
    // Predicated region
    $region26: #{tpu_custom_call.1} parent=1 // pred_check
      _
    $region27: #{tpu_custom_call.1} parent=1 // pred_check_branch
      %288 = sbr.rel (0) target = $region29
    $region28: #{tpu_custom_call.1} parent=1 // pred_region
      _
    $region29: #{tpu_custom_call.1} parent=1 // pred_fallthru
      _
    // Predicated region
    $region30: #{tpu_custom_call.1} parent=1 // pred_check
      _
    $region31: #{tpu_custom_call.1} parent=1 // pred_check_branch
      %290 = sbr.rel (0) target = $region33
    $region32: #{tpu_custom_call.1} parent=1 // pred_region
      %292 = dma.done [#allocation3], 256
    $region33: #{tpu_custom_call.1} parent=1 // pred_fallthru
      _
    // Predicated region
    $region34: #{tpu_custom_call.1} parent=1 // pred_check
      _
    $region35: #{tpu_custom_call.1} parent=1 // pred_check_branch
      %294 = sbr.rel (0) target = $region37
    $region36: #{tpu_custom_call.1} parent=1 // pred_region
      _
    $region37: #{tpu_custom_call.1} parent=1 // pred_fallthru
      _
    %295 = vsyncpa [#allocation3], 1

</llo_original>
